<compile_context>
chip_gen: v7x
topology: tpu7x:2x2x1
jax: 0.10.0
libtpu: 0.0.40
codegen_flags: <defaults>
</compile_context>

<pallas_src>
import math
from functools import partial

import jax
import jax.numpy as jnp
from jax.experimental import pallas as pl
from jax.experimental.pallas import tpu as pltpu


def _ff_kernel(x_ref, w1_ref, b1_ref, w2_ref, b2_ref, o_ref, *, approximate_gelu):
    # x_ref: (TM, Cp) matmul dtype, w1_ref: (Cp, Hp), b1_ref: (1, Hp) f32,
    # w2_ref: (Hp, Cp), b2_ref: (1, Cp) f32, o_ref: (TM, Cp) out dtype.

    # 1x1 conv #1 as matmul on the MXU (bf16 operands, f32 accumulation) + bias.
    h = jnp.dot(x_ref[...], w1_ref[...], preferred_element_type=jnp.float32)
    h = h + b1_ref[...]

    if approximate_gelu:
        # Opt-in tanh GELU: transcendental goes to the EUP slot (cheaper than
        # the erf VPU polynomial) but is not bit-identical to nn.GELU().
        h = jax.nn.gelu(h, approximate=True)
    else:
        # Exact GELU in f32, matches torch.nn.GELU(approximate='none').
        h = 0.5 * h * (1.0 + jax.lax.erf(h * (1.0 / math.sqrt(2.0))))

    # Dropout(p=0.0) is the identity -> nothing to do.

    # 1x1 conv #2 as matmul + bias.
    out = jnp.dot(h.astype(w2_ref.dtype), w2_ref[...],
                  preferred_element_type=jnp.float32)
    out = out + b2_ref[...]
    o_ref[...] = out.astype(o_ref.dtype)


def _round_up(x, m):
    return (x + m - 1) // m * m


def _cdiv(a, b):
    return (a + b - 1) // b


_VMEM_BUDGET = 32 * 1024 * 1024   # conservative tile budget (fits every TPU gen)
_VMEM_LIMIT = 48 * 1024 * 1024    # scoped VMEM limit handed to Mosaic (< v7x 64 MiB)


def _pick_tm(requested_tm, M, Cp, Hp, in_itemsize, out_itemsize):
    # >= 2 grid steps when M allows (keeps both v7x TensorCores busy) and a
    # multiple of 16 (bf16 sublane packing); shrink until the tile set fits.
    tm = min(requested_tm, _round_up(max(_cdiv(M, 2), 16), 16))

    def est(t):
        weights = 2 * Cp * Hp * in_itemsize + (Hp + Cp) * 4  # resident operands
        x_buf = 2 * t * Cp * in_itemsize                     # double-buffered in
        o_buf = 2 * t * Cp * out_itemsize                    # double-buffered out
        tmp = t * Hp * 4 + t * Cp * 4                        # f32 intermediates
        return weights + x_buf + o_buf + tmp

    while tm > 16 and est(tm) > _VMEM_BUDGET:
        tm = _round_up(tm // 2, 16)
    # TODO(synk): if the padded weights alone exceed the budget (very large C),
    # add a K-tiled accumulator path instead of shrinking tm further.
    return max(tm, 16)


def feed_forward(x_nchw, w1, b1, w2, b2, *, tm=512,
                 matmul_dtype=jnp.bfloat16, approximate_gelu=False):
    """x_nchw: (N, C, H, W).  w1: (C//2, C, 1, 1), b1: (C//2,),
    w2: (C, C//2, 1, 1), b2: (C,)   (PyTorch Conv2d parameter shapes)."""
    N, C, H, W = x_nchw.shape
    hid = w1.shape[0]
    M = N * H * W
    out_dtype = x_nchw.dtype

    # Lane-dense padding: channels / hidden to multiples of 128 (exact because
    # padded weight rows/cols and biases are zero).
    Cp = _round_up(C, 128)
    Hp = _round_up(hid, 128)

    in_itemsize = jnp.dtype(matmul_dtype).itemsize
    out_itemsize = jnp.dtype(out_dtype).itemsize
    tm = _pick_tm(tm, M, Cp, Hp, in_itemsize, out_itemsize)
    Mp = _round_up(M, tm)

    # NCHW -> NHWC -> (M, C) -> padded (Mp, Cp), cast once for the MXU.
    x2d = jnp.transpose(x_nchw, (0, 2, 3, 1)).reshape(M, C)
    x2d = jnp.pad(x2d, ((0, Mp - M), (0, Cp - C))).astype(matmul_dtype)

    # Conv weights (out, in, 1, 1) -> matmul weights (in, out), padded + cast.
    w1m = jnp.pad(jnp.transpose(w1.reshape(hid, C)),
                  ((0, Cp - C), (0, Hp - hid))).astype(matmul_dtype)
    w2m = jnp.pad(jnp.transpose(w2.reshape(C, hid)),
                  ((0, Hp - hid), (0, Cp - C))).astype(matmul_dtype)
    b1m = jnp.pad(b1, (0, Hp - hid)).reshape(1, Hp).astype(jnp.float32)
    b2m = jnp.pad(b2, (0, Cp - C)).reshape(1, Cp).astype(jnp.float32)

    cost = pl.CostEstimate(
        flops=4 * M * C * hid,                 # two matmuls, 2 flops/MAC
        transcendentals=M * hid,               # one erf/tanh per hidden activation
        bytes_accessed=(Mp * Cp * (in_itemsize + out_itemsize)
                        + 2 * Cp * Hp * in_itemsize + (Hp + Cp) * 4),
    )

    out2d = pl.pallas_call(
        partial(_ff_kernel, approximate_gelu=approximate_gelu),
        out_shape=jax.ShapeDtypeStruct((Mp, Cp), out_dtype),
        grid_spec=pltpu.PrefetchScalarGridSpec(
            num_scalar_prefetch=0,
            grid=(Mp // tm,),
            in_specs=[
                pl.BlockSpec((tm, Cp), lambda i: (i, 0)),   # x rows tile
                pl.BlockSpec((Cp, Hp), lambda i: (0, 0)),   # w1 (resident)
                pl.BlockSpec((1, Hp), lambda i: (0, 0)),    # b1
                pl.BlockSpec((Hp, Cp), lambda i: (0, 0)),   # w2 (resident)
                pl.BlockSpec((1, Cp), lambda i: (0, 0)),    # b2
            ],
            out_specs=pl.BlockSpec((tm, Cp), lambda i: (i, 0)),
        ),
        compiler_params=pltpu.CompilerParams(
            dimension_semantics=("parallel",),
            vmem_limit_bytes=_VMEM_LIMIT),
        cost_estimate=cost,
    )(x2d, w1m, b1m, w2m, b2m)

    # (Mp, Cp) -> (M, C) -> NHWC -> NCHW
    out2d = out2d[:M, :C]
    return jnp.transpose(out2d.reshape(N, H, W, C), (0, 3, 1, 2))


def _init_params(key, dim):
    """Deterministic Conv2d-style init (uniform +-1/sqrt(fan_in))."""
    hid = dim // 2
    k1, k2, k3, k4 = jax.random.split(key, 4)
    bound1 = 1.0 / math.sqrt(dim * 1 * 1)
    bound2 = 1.0 / math.sqrt(hid * 1 * 1)
    w1 = jax.random.uniform(k1, (hid, dim, 1, 1), jnp.float32, -bound1, bound1)
    b1 = jax.random.uniform(k2, (hid,), jnp.float32, -bound1, bound1)
    w2 = jax.random.uniform(k3, (dim, hid, 1, 1), jnp.float32, -bound2, bound2)
    b2 = jax.random.uniform(k4, (dim,), jnp.float32, -bound2, bound2)
    return w1, b1, w2, b2


if __name__ == "__main__":
    key = jax.random.PRNGKey(0)
    kx, kp = jax.random.split(key)

    N, dim, H, W = 2, 16, 8, 8          # M = N*H*W = 128 rows, hidden = 8
    x = jax.random.normal(kx, (N, dim, H, W), jnp.float32)
    w1, b1, w2, b2 = _init_params(kp, dim)

    out = feed_forward(x, w1, b1, w2, b2)          # bf16 MXU path (default)
    out = jax.block_until_ready(out)
    assert out.shape == (N, dim, H, W)

    # Pure-JAX reference with the SAME mixed precision (bf16 matmul operands,
    # f32 accumulation, f32 exact-erf GELU, zero dropout) for a sanity check.
    hid = dim // 2
    x2d = jnp.transpose(x, (0, 2, 3, 1)).reshape(-1, dim).astype(jnp.bfloat16)
    w1m = jnp.transpose(w1.reshape(hid, dim)).astype(jnp.bfloat16)
    w2m = jnp.transpose(w2.reshape(dim, hid)).astype(jnp.bfloat16)
    h = jnp.dot(x2d, w1m, preferred_element_type=jnp.float32) + b1
    h = 0.5 * h * (1.0 + jax.lax.erf(h / math.sqrt(2.0)))
    ref2d = jnp.dot(h.astype(jnp.bfloat16), w2m,
                    preferred_element_type=jnp.float32) + b2
    ref = jnp.transpose(ref2d.reshape(N, H, W, dim), (0, 3, 1, 2))

    assert jnp.allclose(out, ref, atol=5e-3, rtol=5e-3), (
        float(jnp.max(jnp.abs(out - ref))))
    print("KERNEL_OK")
</pallas_src>

<mosaic_0001>
module attributes {stable_mosaic.version = 11 : i64} {
  func.func @_ff_kernel(%arg0: i32, %arg1: memref<64x128xbf16, #tpu.memory_space<vmem>>, %arg2: memref<128x128xbf16, #tpu.memory_space<vmem>>, %arg3: memref<1x128xf32, #tpu.memory_space<vmem>>, %arg4: memref<128x128xbf16, #tpu.memory_space<vmem>>, %arg5: memref<1x128xf32, #tpu.memory_space<vmem>>, %arg6: memref<64x128xf32, #tpu.memory_space<vmem>>) attributes {dimension_semantics = [#tpu.dimension_semantics<parallel>], iteration_bounds = array<i64: 2>, scalar_prefetch = 0 : i64, scratch_operands = 0 : i64, tpu.core_type = #tpu.core_type<tc>, window_params = [{transform_indices = @transform_0, window_bounds = array<i64: 64, 128>}, {pipeline_mode = #tpu.pipeline_mode<synchronous>, transform_indices = @transform_1, window_bounds = array<i64: 128, 128>}, {pipeline_mode = #tpu.pipeline_mode<synchronous>, transform_indices = @transform_2, window_bounds = array<i64: 1, 128>}, {pipeline_mode = #tpu.pipeline_mode<synchronous>, transform_indices = @transform_3, window_bounds = array<i64: 128, 128>}, {pipeline_mode = #tpu.pipeline_mode<synchronous>, transform_indices = @transform_4, window_bounds = array<i64: 1, 128>}, {transform_indices = @transform_5, window_bounds = array<i64: 64, 128>}]} {
    %c0 = arith.constant 0 : index
    %c0_0 = arith.constant 0 : index
    %0 = vector.load %arg1[%c0, %c0_0] : memref<64x128xbf16, #tpu.memory_space<vmem>>, vector<64x128xbf16>
    %c0_1 = arith.constant 0 : index
    %c0_2 = arith.constant 0 : index
    %1 = vector.load %arg2[%c0_1, %c0_2] : memref<128x128xbf16, #tpu.memory_space<vmem>>, vector<128x128xbf16>
    %cst = arith.constant dense<0.000000e+00> : vector<64x128xf32>
    %2 = tpu.matmul %0, %1, %cst {dimension_numbers = #tpu.dot_dimension_numbers<[1], [0], [0], [1], [0, 0, 1, 1], [], []>} : vector<64x128xbf16>, vector<128x128xbf16>, vector<64x128xf32> -> vector<64x128xf32>
    %c0_3 = arith.constant 0 : index
    %c0_4 = arith.constant 0 : index
    %3 = vector.load %arg3[%c0_3, %c0_4] : memref<1x128xf32, #tpu.memory_space<vmem>>, vector<1x128xf32>
    %4 = vector.broadcast %3 : vector<1x128xf32> to vector<64x128xf32>
    %5 = arith.addf %2, %4 : vector<64x128xf32>
    %cst_5 = arith.constant 5.000000e-01 : f32
    %6 = vector.broadcast %cst_5 : f32 to vector<64x128xf32>
    %7 = arith.mulf %6, %5 : vector<64x128xf32>
    %cst_6 = arith.constant 0.707106769 : f32
    %8 = vector.broadcast %cst_6 : f32 to vector<64x128xf32>
    %9 = arith.mulf %5, %8 : vector<64x128xf32>
    %10 = math.erf %9 : vector<64x128xf32>
    %cst_7 = arith.constant 1.000000e+00 : f32
    %11 = vector.broadcast %cst_7 : f32 to vector<64x128xf32>
    %12 = arith.addf %11, %10 : vector<64x128xf32>
    %13 = arith.mulf %7, %12 : vector<64x128xf32>
    %14 = arith.truncf %13 : vector<64x128xf32> to vector<64x128xbf16>
    %c0_8 = arith.constant 0 : index
    %c0_9 = arith.constant 0 : index
    %15 = vector.load %arg4[%c0_8, %c0_9] : memref<128x128xbf16, #tpu.memory_space<vmem>>, vector<128x128xbf16>
    %cst_10 = arith.constant dense<0.000000e+00> : vector<64x128xf32>
    %16 = tpu.matmul %14, %15, %cst_10 {dimension_numbers = #tpu.dot_dimension_numbers<[1], [0], [0], [1], [0, 0, 1, 1], [], []>} : vector<64x128xbf16>, vector<128x128xbf16>, vector<64x128xf32> -> vector<64x128xf32>
    %c0_11 = arith.constant 0 : index
    %c0_12 = arith.constant 0 : index
    %17 = vector.load %arg5[%c0_11, %c0_12] : memref<1x128xf32, #tpu.memory_space<vmem>>, vector<1x128xf32>
    %18 = vector.broadcast %17 : vector<1x128xf32> to vector<64x128xf32>
    %19 = arith.addf %16, %18 : vector<64x128xf32>
    %c0_13 = arith.constant 0 : index
    %c0_14 = arith.constant 0 : index
    %20 = vector.load %arg6[%c0_13, %c0_14] : memref<64x128xf32, #tpu.memory_space<vmem>>, vector<64x128xf32>
    tpu.vector_store %arg6[%c0_13, %c0_14], %19 {strides = array<i32>} : memref<64x128xf32, #tpu.memory_space<vmem>>, vector<64x128xf32>,
    return
  }
  func.func @transform_0(%arg0: i32) -> (i32, i32) {
    %c0_i32 = arith.constant 0 : i32
    %c0_i32_0 = arith.constant 0 : i32
    return %arg0, %c0_i32 : i32, i32
  }
  func.func @transform_1(%arg0: i32) -> (i32, i32) {
    %c0_i32 = arith.constant 0 : i32
    %c0_i32_0 = arith.constant 0 : i32
    %c0_i32_1 = arith.constant 0 : i32
    return %c0_i32, %c0_i32_0 : i32, i32
  }
  func.func @transform_2(%arg0: i32) -> (i32, i32) {
    %c0_i32 = arith.constant 0 : i32
    %c0_i32_0 = arith.constant 0 : i32
    %c0_i32_1 = arith.constant 0 : i32
    return %c0_i32, %c0_i32_0 : i32, i32
  }
  func.func @transform_3(%arg0: i32) -> (i32, i32) {
    %c0_i32 = arith.constant 0 : i32
    %c0_i32_0 = arith.constant 0 : i32
    %c0_i32_1 = arith.constant 0 : i32
    return %c0_i32, %c0_i32_0 : i32, i32
  }
  func.func @transform_4(%arg0: i32) -> (i32, i32) {
    %c0_i32 = arith.constant 0 : i32
    %c0_i32_0 = arith.constant 0 : i32
    %c0_i32_1 = arith.constant 0 : i32
    return %c0_i32, %c0_i32_0 : i32, i32
  }
  func.func @transform_5(%arg0: i32) -> (i32, i32) {
    %c0_i32 = arith.constant 0 : i32
    %c0_i32_0 = arith.constant 0 : i32
    return %arg0, %c0_i32 : i32, i32
  }
}

</mosaic_0001>

<llo_original>
// kernel: tpu_custom_call.1
$region0: #{tpu_custom_call.1}
  #allocation0 [shape = 'u32[]', space=smem, size = 0x4, offset = 0x4, fixed_abs, tag = 'smem constant byte address 0x4 - core index']
  #allocation1 [shape = 'u32[144,128]{1,0:T(1,128)}', space=vmem, size = 0x12000, scoped, tag = 'internal scratch']
  %s0 = inlined_call_operand.hbm [shape: bf16[128,128], index: 0, kind: input, shape index: {}]
  %s1 = inlined_call_operand.hbm [shape: bf16[128,128], index: 1, kind: input, shape index: {}]
  %s2 = inlined_call_operand.vmem [shape: f32[1,128], index: 2, kind: input, shape index: {}]
  %s3 = inlined_call_operand.hbm [shape: bf16[128,128], index: 3, kind: input, shape index: {}]
  %s4 = inlined_call_operand.vmem [shape: f32[1,128], index: 4, kind: input, shape index: {}]
  %s5 = inlined_call_operand.hbm [shape: f32[128,128], index: 5, kind: output, shape index: {}]
  %s6 = sld [smem:[#allocation0]]
  $region65: #{tpu_custom_call.1} parent=0
    _
  %s8 = ssub.s32 1, %s6
  %s9 = scalar_select 0, %s8, %s6
  $region1: #{tpu_custom_call.1} parent=0
    #allocation2 [shape = 'u8[32768]{0}', space=vmem, size = 0x8000, scoped, tag = 'input window, operand 0']
    #allocation3 [shape = 's32[2]{0}', space=sflag, size = 0x8, scoped, tag = 'scoped memory for tpu_custom_call.1']
    #allocation4 [shape = 's32[2]{0}', space=sflag, size = 0x8, scoped, tag = 'scoped memory for tpu_custom_call.1']
    #allocation5 [shape = 'u8[32768]{0}', space=vmem, size = 0x8000, scoped, tag = 'input window, operand 1, single buffered']
    #allocation6 [shape = 's32[1]{0}', space=sflag, size = 0x4, scoped, tag = 'scoped memory for tpu_custom_call.1']
    #allocation7 [shape = 'u8[32768]{0}', space=vmem, size = 0x8000, scoped, tag = 'input window, operand 3, single buffered']
    #allocation8 [shape = 'u8[65536]{0}', space=vmem, size = 0x10000, scoped, tag = 'output window, operand 0']
    %10 = vsyncpa [#allocation3], 0
    %s11 = scalar_lea.sflag [#allocation3], 1
    %12 = vsyncpa %s11, 0
    %13 = vsyncpa [#allocation6], 0
    %14 = vsyncpa [#allocation4], 0
    %s15 = scalar_lea.sflag [#allocation4], 1
    %16 = vsyncpa %s15, 0
    loop: start=0, step=1, limit=4
    $region2: #{tpu_custom_call.1} parent=1 // loop_pre_header
      _
    $region3: #{tpu_custom_call.1} parent=1 // loop_header
      %s18 = sphi 0, %s22
      %p19 = scmp.ge.s32.totalorder %s18, 4
      %s28 = sphi 0, %s30
      %s31 = sphi 0, %s28
      %s32 = sphi 0, %s31
      %s48 = sphi 0, %s32
      %s52 = sphi 0, %s52
      %s54 = sphi 0, %s52
      %s55 = sphi 0, %s54
      %s69 = sphi 0, %s55
      %s73 = sphi 0, %s73
      %s75 = sphi 0, %s73
      %s76 = sphi 0, %s75
      %s90 = sphi 0, %s76
      %s94 = sphi 0, %s94
      %s96 = sphi 0, %s94
      %s97 = sphi 0, %s96
      %s111 = sphi 0, %s97
      %s115 = sphi 0, %s115
      %s117 = sphi 0, %s115
      %s118 = sphi 0, %s117
      %s132 = sphi 0, %s118
      %s138 = sphi 0, %s140
      %s141 = sphi 0, %s138
      %s142 = sphi 0, %s141
      %s158 = sphi 0, %s142
    $region4: #{tpu_custom_call.1} parent=1 // loop_header_branch
      %21 = sbr.rel (%p19) target = $region8
    $region5: #{tpu_custom_call.1} parent=1 // loop_body
      %s23 = ssub.s32 %s18, 1
      %s24 = ssub.s32 %s18, 2
      %s25 = sadd.s32 %s18, 1
      %s26 = ssub.s32 %s18, %s25
      %p27 = scmp.eq.s32.totalorder %s26, 0
      %s29 = sadd.s32 %s28, 1
      %s30 = scalar_select %p27, %s28, %s29
      %p33 = pneg %p27
      %p34 = scmp.eq.s32.totalorder %s18, 1
      %p35 = por %p33, %p34
      %p36 = scmp.ne.s32.totalorder %s28, %s31
      %p37 = scmp.eq.s32.totalorder %s18, 0
      %p38 = por %p36, %p37
      %p39 = scmp.ne.s32.totalorder %s28, %s31
      %p40 = scmp.eq.s32.totalorder %s23, 1
      %p41 = por %p39, %p40
      %p42 = scmp.ne.s32.totalorder %s31, %s32
      %p43 = scmp.eq.s32.totalorder %s23, 0
      %p44 = por %p42, %p43
      %p45 = scmp.ne.s32.totalorder %s31, %s32
      %p46 = scmp.eq.s32.totalorder %s24, 1
      %p47 = por %p45, %p46
      %p49 = scmp.ne.s32.totalorder %s32, %s48
      %p50 = scmp.eq.s32.totalorder %s24, 0
      %p51 = por %p49, %p50
      %s53 = sadd.s32 %s52, 1
      %p56 = scmp.eq.s32.totalorder %s18, 1
      %p57 = scmp.ne.s32.totalorder %s52, %s54
      %p58 = scmp.eq.s32.totalorder %s18, 0
      %p59 = por %p57, %p58
      %p60 = scmp.ne.s32.totalorder %s52, %s54
      %p61 = scmp.eq.s32.totalorder %s23, 1
      %p62 = por %p60, %p61
      %p63 = scmp.ne.s32.totalorder %s54, %s55
      %p64 = scmp.eq.s32.totalorder %s23, 0
      %p65 = por %p63, %p64
      %p66 = scmp.ne.s32.totalorder %s54, %s55
      %p67 = scmp.eq.s32.totalorder %s24, 1
      %p68 = por %p66, %p67
      %p70 = scmp.ne.s32.totalorder %s55, %s69
      %p71 = scmp.eq.s32.totalorder %s24, 0
      %p72 = por %p70, %p71
      %s74 = sadd.s32 %s73, 1
      %p77 = scmp.eq.s32.totalorder %s18, 1
      %p78 = scmp.ne.s32.totalorder %s73, %s75
      %p79 = scmp.eq.s32.totalorder %s18, 0
      %p80 = por %p78, %p79
      %p81 = scmp.ne.s32.totalorder %s73, %s75
      %p82 = scmp.eq.s32.totalorder %s23, 1
      %p83 = por %p81, %p82
      %p84 = scmp.ne.s32.totalorder %s75, %s76
      %p85 = scmp.eq.s32.totalorder %s23, 0
      %p86 = por %p84, %p85
      %p87 = scmp.ne.s32.totalorder %s75, %s76
      %p88 = scmp.eq.s32.totalorder %s24, 1
      %p89 = por %p87, %p88
      %p91 = scmp.ne.s32.totalorder %s76, %s90
      %p92 = scmp.eq.s32.totalorder %s24, 0
      %p93 = por %p91, %p92
      %s95 = sadd.s32 %s94, 1
      %p98 = scmp.eq.s32.totalorder %s18, 1
      %p99 = scmp.ne.s32.totalorder %s94, %s96
      %p100 = scmp.eq.s32.totalorder %s18, 0
      %p101 = por %p99, %p100
      %p102 = scmp.ne.s32.totalorder %s94, %s96
      %p103 = scmp.eq.s32.totalorder %s23, 1
      %p104 = por %p102, %p103
      %p105 = scmp.ne.s32.totalorder %s96, %s97
      %p106 = scmp.eq.s32.totalorder %s23, 0
      %p107 = por %p105, %p106
      %p108 = scmp.ne.s32.totalorder %s96, %s97
      %p109 = scmp.eq.s32.totalorder %s24, 1
      %p110 = por %p108, %p109
      %p112 = scmp.ne.s32.totalorder %s97, %s111
      %p113 = scmp.eq.s32.totalorder %s24, 0
      %p114 = por %p112, %p113
      %s116 = sadd.s32 %s115, 1
      %p119 = scmp.eq.s32.totalorder %s18, 1
      %p120 = scmp.ne.s32.totalorder %s115, %s117
      %p121 = scmp.eq.s32.totalorder %s18, 0
      %p122 = por %p120, %p121
      %p123 = scmp.ne.s32.totalorder %s115, %s117
      %p124 = scmp.eq.s32.totalorder %s23, 1
      %p125 = por %p123, %p124
      %p126 = scmp.ne.s32.totalorder %s117, %s118
      %p127 = scmp.eq.s32.totalorder %s23, 0
      %p128 = por %p126, %p127
      %p129 = scmp.ne.s32.totalorder %s117, %s118
      %p130 = scmp.eq.s32.totalorder %s24, 1
      %p131 = por %p129, %p130
      %p133 = scmp.ne.s32.totalorder %s118, %s132
      %p134 = scmp.eq.s32.totalorder %s24, 0
      %p135 = por %p133, %p134
      %s136 = ssub.s32 %s18, %s25
      %p137 = scmp.eq.s32.totalorder %s136, 0
      %s139 = sadd.s32 %s138, 1
      %s140 = scalar_select %p137, %s138, %s139
      %p143 = pneg %p137
      %p144 = scmp.eq.s32.totalorder %s18, 1
      %p145 = por %p143, %p144
      %p146 = scmp.ne.s32.totalorder %s138, %s141
      %p147 = scmp.eq.s32.totalorder %s18, 0
      %p148 = por %p146, %p147
      %p149 = scmp.ne.s32.totalorder %s138, %s141
      %p150 = scmp.eq.s32.totalorder %s23, 1
      %p151 = por %p149, %p150
      %p152 = scmp.ne.s32.totalorder %s141, %s142
      %p153 = scmp.eq.s32.totalorder %s23, 0
      %p154 = por %p152, %p153
      %p155 = scmp.ne.s32.totalorder %s141, %s142
      %p156 = scmp.eq.s32.totalorder %s24, 1
      %p157 = por %p155, %p156
      %p159 = scmp.ne.s32.totalorder %s142, %s158
      %p160 = scmp.eq.s32.totalorder %s24, 0
      %p161 = por %p159, %p160
      %p162 = scmp.le.s32.totalorder 1, %s18
      %p163 = scmp.lt.s32.totalorder %s18, 3
      %p164 = pnand %p162, %p163
      %p165 = pneg %p164
      // Predicated region
      $region9: #{tpu_custom_call.1} parent=5 // pred_check
        _
      $region10: #{tpu_custom_call.1} parent=5 // pred_check_branch
        %167 = sbr.rel (%p164) target = $region12
      $region11: #{tpu_custom_call.1} parent=5 // pred_region
        %s168 = ssub.s32 %s18, 1
        // Predicated region
        $region13: #{tpu_custom_call.1} parent=11 // pred_check
          %p169 = pneg %p65
        $region14: #{tpu_custom_call.1} parent=11 // pred_check_branch
          %171 = sbr.rel (%p169) target = $region16
        $region15: #{tpu_custom_call.1} parent=11 // pred_region
          %s173 = ssub.s32 1024, 1024
          %174 = vsyncadd [#allocation6], %s173
          %s175 = sshll.u32 [#allocation5], 4
          %s176 = int_to_ptr.vmem [resolvable:$true] %s175
          %181 = dma.hbm_to_vmem [thread:$0]  %s1, 1024, %s176, [#allocation6], 64, 64, 4
        $region16: #{tpu_custom_call.1} parent=11 // pred_fallthru
          _
        // Predicated region
        $region17: #{tpu_custom_call.1} parent=11 // pred_check
          %p182 = pneg %p86
        $region18: #{tpu_custom_call.1} parent=11 // pred_check_branch
          %184 = sbr.rel (%p182) target = $region20
        $region19: #{tpu_custom_call.1} parent=11 // pred_region
          _
        $region20: #{tpu_custom_call.1} parent=11 // pred_fallthru
          _
        // Predicated region
        $region21: #{tpu_custom_call.1} parent=11 // pred_check
          %p185 = pneg %p107
        $region22: #{tpu_custom_call.1} parent=11 // pred_check_branch
          %187 = sbr.rel (%p185) target = $region24
        $region23: #{tpu_custom_call.1} parent=11 // pred_region
          %s189 = ssub.s32 1024, 1024
          %190 = vsyncadd [#allocation6], %s189
          %s191 = sshll.u32 [#allocation7], 4
          %s192 = int_to_ptr.vmem [resolvable:$true] %s191
          %197 = dma.hbm_to_vmem [thread:$0]  %s3, 1024, %s192, [#allocation6], 64, 64, 4
        $region24: #{tpu_custom_call.1} parent=11 // pred_fallthru
          _
        // Predicated region
        $region25: #{tpu_custom_call.1} parent=11 // pred_check
          %p198 = pneg %p128
        $region26: #{tpu_custom_call.1} parent=11 // pred_check_branch
          %200 = sbr.rel (%p198) target = $region28
        $region27: #{tpu_custom_call.1} parent=11 // pred_region
          _
        $region28: #{tpu_custom_call.1} parent=11 // pred_fallthru
          _
      $region12: #{tpu_custom_call.1} parent=5 // pred_fallthru
        _
      %p201 = scmp.lt.s32.totalorder %s18, 2
      // Predicated region
      $region29: #{tpu_custom_call.1} parent=5 // pred_check
        %p202 = pneg %p201
      $region30: #{tpu_custom_call.1} parent=5 // pred_check_branch
        %204 = sbr.rel (%p202) target = $region32
      $region31: #{tpu_custom_call.1} parent=5 // pred_region
        // Predicated region
        $region33: #{tpu_custom_call.1} parent=31 // pred_check
          %p205 = pneg %p38
        $region34: #{tpu_custom_call.1} parent=31 // pred_check_branch
          %207 = sbr.rel (%p205) target = $region36
        $region35: #{tpu_custom_call.1} parent=31 // pred_region
          %s208 = sand.u32 %s28, 1
          %s209 = scalar_lea.sflag [#allocation3], %s208
          %s210 = sand.u32 %s28, 1
          %s211 = smul.addr %s210, 32
          %s212 = scalar_lea.vmem [#allocation2], %s211
          %s213 = smul.u32 8, %s18
          %s215 = ssub.s32 512, 512
          %216 = vsyncadd %s209, %s215
          %s217 = smul.addr %s213, 64
          %s218 = scalar_lea.hbm %s0, %s217
          %s219 = sshll.u32 %s212, 4
          %s220 = int_to_ptr.vmem [resolvable:$true] %s219
          %225 = dma.hbm_to_vmem [thread:$0]  %s218, 512, %s220, %s209, 64, 64, 4
        $region36: #{tpu_custom_call.1} parent=31 // pred_fallthru
          _
      $region32: #{tpu_custom_call.1} parent=5 // pred_fallthru
        _
      %p226 = scmp.le.s32.totalorder 1, %s18
      %p227 = scmp.lt.s32.totalorder %s18, 3
      %p228 = pnand %p226, %p227
      %p229 = pneg %p228
      // Predicated region
      $region37: #{tpu_custom_call.1} parent=5 // pred_check
        _
      $region38: #{tpu_custom_call.1} parent=5 // pred_check_branch
        %231 = sbr.rel (%p228) target = $region40
      $region39: #{tpu_custom_call.1} parent=5 // pred_region
        %s232 = ssub.s32 %s18, 1
        %s233 = sand.u32 %s31, 1
        %s234 = scalar_lea.sflag [#allocation3], %s233
        %s235 = sand.u32 %s31, 1
        %s236 = smul.addr %s235, 32
        %s237 = scalar_lea.vmem [#allocation2], %s236
        // Predicated region
        $region41: #{tpu_custom_call.1} parent=39 // pred_check
          %p238 = pneg %p44
        $region42: #{tpu_custom_call.1} parent=39 // pred_check_branch
          %240 = sbr.rel (%p238) target = $region44
        $region43: #{tpu_custom_call.1} parent=39 // pred_region
          %241 = dma.done %s234, 512
        $region44: #{tpu_custom_call.1} parent=39 // pred_fallthru
          _
        // Predicated region
        $region45: #{tpu_custom_call.1} parent=39 // pred_check
          %p242 = pneg %p65
        $region46: #{tpu_custom_call.1} parent=39 // pred_check_branch
          %244 = sbr.rel (%p242) target = $region48
        $region47: #{tpu_custom_call.1} parent=39 // pred_region
          %245 = dma.done [#allocation6], 1024
        $region48: #{tpu_custom_call.1} parent=39 // pred_fallthru
          _
        // Predicated region
        $region49: #{tpu_custom_call.1} parent=39 // pred_check
          %p246 = pneg %p107
        $region50: #{tpu_custom_call.1} parent=39 // pred_check_branch
          %248 = sbr.rel (%p246) target = $region52
        $region51: #{tpu_custom_call.1} parent=39 // pred_region
          %249 = dma.done [#allocation6], 1024
        $region52: #{tpu_custom_call.1} parent=39 // pred_fallthru
          _
        %s250 = sand.u32 %s31, 1
        %s251 = scalar_lea.sflag [#allocation3], %s250
        %s252 = sand.u32 %s31, 1
        %s253 = smul.addr %s252, 32
        %s254 = scalar_lea.vmem [#allocation2], %s253
        %p255 = pneg %p44
        %p256 = pneg %p41
        %p257 = pneg %p65
        %p258 = pneg %p62
        %p259 = pneg %p86
        %p260 = pneg %p83
        %p261 = pneg %p107
        %p262 = pneg %p104
        %p263 = pneg %p128
        %p264 = pneg %p125
        %p265 = pneg %p154
        %p266 = pneg %p151
        %s267 = sand.u32 %s141, 1
        %s268 = scalar_lea.sflag [#allocation4], %s267
        %s269 = sand.u32 %s141, 1
        %s270 = smul.addr %s269, 64
        %s271 = scalar_lea.vmem [#allocation8], %s270
        %s272 = smul.u32 8, %s23
        %s273 = smul.u32 8, %s23
        %v275 = vld [vmem:[%s237] sm:$0xf]
        %v276 = vld [vmem:[%s237 + $0x4] sm:$0xf]
        %v277 = vld [vmem:[%s237 + $0x8] sm:$0xf]
        %v278 = vld [vmem:[%s237 + $0xc] sm:$0xf]
        %v279 = vld [vmem:[%s237 + $0x10] sm:$0xf]
        %v280 = vld [vmem:[%s237 + $0x14] sm:$0xf]
        %v281 = vld [vmem:[%s237 + $0x18] sm:$0xf]
        %v282 = vld [vmem:[%s237 + $0x1c] sm:$0xf]
        %v283 = vld [vmem:[#allocation5] sm:$0xf]
        %v284 = vld [vmem:[#allocation5 + $0x4] sm:$0xf]
        %v285 = vld [vmem:[#allocation5 + $0x8] sm:$0xf]
        %v286 = vld [vmem:[#allocation5 + $0xc] sm:$0xf]
        %v287 = vld [vmem:[#allocation5 + $0x10] sm:$0xf]
        %v288 = vld [vmem:[#allocation5 + $0x14] sm:$0xf]
        %v289 = vld [vmem:[#allocation5 + $0x18] sm:$0xf]
        %v290 = vld [vmem:[#allocation5 + $0x1c] sm:$0xf]
        %v291 = vld [vmem:[#allocation5 + $0x20] sm:$0xf]
        %v292 = vld [vmem:[#allocation5 + $0x24] sm:$0xf]
        %v293 = vld [vmem:[#allocation5 + $0x28] sm:$0xf]
        %v294 = vld [vmem:[#allocation5 + $0x2c] sm:$0xf]
        %v295 = vld [vmem:[#allocation5 + $0x30] sm:$0xf]
        %v296 = vld [vmem:[#allocation5 + $0x34] sm:$0xf]
        %v297 = vld [vmem:[#allocation5 + $0x38] sm:$0xf]
        %v298 = vld [vmem:[#allocation5 + $0x3c] sm:$0xf]
        %v299 = vld [vmem:[%s2] sm:$0x1]
        %v301 = vlaneseq
        %v302 = vshrl.u32 %v301, 7
        %v303 = vsub.s32 0, %v302
        %v304 = vrot.slane %v299, %v303
        %v314 = vunpack.c.l.b16 %v275
        %v315 = vunpack.c.l.b16 %v276
        %v316 = vunpack.c.l.b16 %v277
        %v317 = vunpack.c.l.b16 %v278
        %v318 = vunpack.c.l.b16 %v279
        %v319 = vunpack.c.l.b16 %v280
        %v320 = vunpack.c.l.b16 %v281
        %v321 = vunpack.c.l.b16 %v282
        %v322 = vpack.c.b16 %v315, %v314
        %v323 = vpack.c.b16 %v317, %v316
        %v324 = vpack.c.b16 %v319, %v318
        %v325 = vpack.c.b16 %v321, %v320
        %v346 = vunpack.c.l.b16 %v283
        %v347 = vunpack.c.l.b16 %v284
        %v348 = vunpack.c.l.b16 %v285
        %v349 = vunpack.c.l.b16 %v286
        %v350 = vunpack.c.l.b16 %v287
        %v351 = vunpack.c.l.b16 %v288
        %v352 = vunpack.c.l.b16 %v289
        %v353 = vunpack.c.l.b16 %v290
        %v354 = vunpack.c.l.b16 %v291
        %v355 = vunpack.c.l.b16 %v292
        %v356 = vunpack.c.l.b16 %v293
        %v357 = vunpack.c.l.b16 %v294
        %v358 = vunpack.c.l.b16 %v295
        %v359 = vunpack.c.l.b16 %v296
        %v360 = vunpack.c.l.b16 %v297
        %v361 = vunpack.c.l.b16 %v298
        %v362 = vpack.c.b16 %v347, %v346
        %v363 = vpack.c.b16 %v349, %v348
        %v364 = vpack.c.b16 %v351, %v350
        %v365 = vpack.c.b16 %v353, %v352
        %v366 = vpack.c.b16 %v355, %v354
        %v367 = vpack.c.b16 %v357, %v356
        %v368 = vpack.c.b16 %v359, %v358
        %v369 = vpack.c.b16 %v361, %v360
        %378 = vmatprep.subr.bf16.mxu0 0
        %379 = vmatpush1.bf16.msra.mxu0 %v362
        %380 = vmatprep.subr.bf16.mxu0 0
        %381 = vmatpush1.bf16.msra.mxu0 %v363
        %382 = vmatprep.subr.bf16.mxu0 0
        %383 = vmatpush1.bf16.msra.mxu0 %v364
        %384 = vmatprep.subr.bf16.mxu0 0
        %385 = vmatpush1.bf16.msra.mxu0 %v365
        %386 = vmatprep.subr.bf16.mxu0 0
        %387 = vmatpush1.bf16.msra.mxu0 %v366
        %388 = vmatprep.subr.bf16.mxu0 0
        %389 = vmatpush1.bf16.msra.mxu0 %v367
        %390 = vmatprep.subr.bf16.mxu0 0
        %391 = vmatpush1.bf16.msra.mxu0 %v368
        %392 = vmatprep.subr.bf16.mxu0 0
        %393 = vmatpush1.bf16.msra.mxu0 %v369
        %394 = vmatprep.subr.bf16.mxu0 0
        %395 = vmatpush1.bf16.msra.mxu0 0
        %396 = vmatprep.subr.bf16.mxu0 0
        %397 = vmatpush1.bf16.msra.mxu0 0
        %398 = vmatprep.subr.bf16.mxu0 0
        %399 = vmatpush1.bf16.msra.mxu0 0
        %400 = vmatprep.subr.bf16.mxu0 0
        %401 = vmatpush1.bf16.msra.mxu0 0
        %402 = vmatprep.subr.bf16.mxu0 0
        %403 = vmatpush1.bf16.msra.mxu0 0
        %404 = vmatprep.subr.bf16.mxu0 0
        %405 = vmatpush1.bf16.msra.mxu0 0
        %406 = vmatprep.subr.bf16.mxu0 0
        %407 = vmatpush1.bf16.msra.mxu0 0
        %408 = vmatprep.subr.bf16.mxu0 0
        %409 = vmatpush1.bf16.msra.mxu0 0
        %410 = vmatprep.mubr.bf16.mxu0 0
        %411 = vmatmul.mubr.bf16.gmra.mrb[0].mxu0 %v322
        %v412 = vpop.f32.mrb[0].mxu0
        %v413 = vadd.f32 %v304, %v412
        %v414 = vpop.f32.mrb[0].mxu0
        %v415 = vpop.f32.mrb[0].mxu0
        %v416 = vadd.f32 %v304, %v415
        %v417 = vpop.f32.mrb[0].mxu0
        %418 = vmatprep.mubr.bf16.mxu0 0
        %419 = vmatmul.mubr.bf16.gmra.mrb[0].mxu0 %v323
        %v420 = vpop.f32.mrb[0].mxu0
        %v421 = vadd.f32 %v304, %v420
        %v422 = vpop.f32.mrb[0].mxu0
        %v423 = vpop.f32.mrb[0].mxu0
        %v424 = vadd.f32 %v304, %v423
        %v425 = vpop.f32.mrb[0].mxu0
        %426 = vmatprep.mubr.bf16.mxu0 0
        %427 = vmatmul.mubr.bf16.gmra.mrb[0].mxu0 %v324
        %v428 = vpop.f32.mrb[0].mxu0
        %v429 = vadd.f32 %v304, %v428
        %v430 = vpop.f32.mrb[0].mxu0
        %v431 = vpop.f32.mrb[0].mxu0
        %v432 = vadd.f32 %v304, %v431
        %v433 = vpop.f32.mrb[0].mxu0
        %434 = vmatprep.mubr.bf16.mxu0 0
        %435 = vmatmul.mubr.bf16.gmra.mrb[0].mxu0 %v325
        %v436 = vpop.f32.mrb[0].mxu0
        %v437 = vadd.f32 %v304, %v436
        %v438 = vpop.f32.mrb[0].mxu0
        %v439 = vpop.f32.mrb[0].mxu0
        %v440 = vadd.f32 %v304, %v439
        %v441 = vpop.f32.mrb[0].mxu0
        %442 = vdwg.mxu0
        %v443 = vmul.f32 %v413, 0.5
        %v444 = vmul.f32 %v416, 0.5
        %v445 = vmul.f32 %v421, 0.5
        %v446 = vmul.f32 %v424, 0.5
        %v447 = vmul.f32 %v429, 0.5
        %v448 = vmul.f32 %v432, 0.5
        %v449 = vmul.f32 %v437, 0.5
        %v450 = vmul.f32 %v440, 0.5
        %v451 = vmul.f32 %v413, 0.70710677
        %v452 = vmul.f32 %v416, 0.70710677
        %v453 = vmul.f32 %v421, 0.70710677
        %v454 = vmul.f32 %v424, 0.70710677
        %v455 = vmul.f32 %v429, 0.70710677
        %v456 = vmul.f32 %v432, 0.70710677
        %v457 = vmul.f32 %v437, 0.70710677
        %v458 = vmul.f32 %v440, 0.70710677
        %v459 = verf.f32.pop %v451
        %v460 = verf.f32.pop %v452
        %v461 = verf.f32.pop %v453
        %v462 = verf.f32.pop %v454
        %v463 = verf.f32.pop %v455
        %v464 = verf.f32.pop %v456
        %v465 = verf.f32.pop %v457
        %v466 = verf.f32.pop %v458
        %v467 = vadd.f32 %v459, 1.0
        %v468 = vadd.f32 %v460, 1.0
        %v469 = vadd.f32 %v461, 1.0
        %v470 = vadd.f32 %v462, 1.0
        %v471 = vadd.f32 %v463, 1.0
        %v472 = vadd.f32 %v464, 1.0
        %v473 = vadd.f32 %v465, 1.0
        %v474 = vadd.f32 %v466, 1.0
        %v475 = vmul.f32 %v443, %v467
        %v476 = vmul.f32 %v444, %v468
        %v477 = vmul.f32 %v445, %v469
        %v478 = vmul.f32 %v446, %v470
        %v479 = vmul.f32 %v447, %v471
        %v480 = vmul.f32 %v448, %v472
        %v481 = vmul.f32 %v449, %v473
        %v482 = vmul.f32 %v450, %v474
        %v483 = vpack.c.bf16 %v476, %v475
        %v484 = vpack.c.bf16 %v478, %v477
        %v485 = vpack.c.bf16 %v480, %v479
        %v486 = vpack.c.bf16 %v482, %v481
        %v487 = vld [vmem:[#allocation7] sm:$0xf]
        %v488 = vld [vmem:[#allocation7 + $0x4] sm:$0xf]
        %v489 = vld [vmem:[#allocation7 + $0x8] sm:$0xf]
        %v490 = vld [vmem:[#allocation7 + $0xc] sm:$0xf]
        %v491 = vld [vmem:[#allocation7 + $0x10] sm:$0xf]
        %v492 = vld [vmem:[#allocation7 + $0x14] sm:$0xf]
        %v493 = vld [vmem:[#allocation7 + $0x18] sm:$0xf]
        %v494 = vld [vmem:[#allocation7 + $0x1c] sm:$0xf]
        %v495 = vld [vmem:[#allocation7 + $0x20] sm:$0xf]
        %v496 = vld [vmem:[#allocation7 + $0x24] sm:$0xf]
        %v497 = vld [vmem:[#allocation7 + $0x28] sm:$0xf]
        %v498 = vld [vmem:[#allocation7 + $0x2c] sm:$0xf]
        %v499 = vld [vmem:[#allocation7 + $0x30] sm:$0xf]
        %v500 = vld [vmem:[#allocation7 + $0x34] sm:$0xf]
        %v501 = vld [vmem:[#allocation7 + $0x38] sm:$0xf]
        %v502 = vld [vmem:[#allocation7 + $0x3c] sm:$0xf]
        %v503 = vld [vmem:[%s4] sm:$0x1]
        %v505 = vlaneseq
        %v506 = vshrl.u32 %v505, 7
        %v507 = vsub.s32 0, %v506
        %v508 = vrot.slane %v503, %v507
        %v526 = vunpack.c.l.b16 %v487
        %v527 = vunpack.c.l.b16 %v488
        %v528 = vunpack.c.l.b16 %v489
        %v529 = vunpack.c.l.b16 %v490
        %v530 = vunpack.c.l.b16 %v491
        %v531 = vunpack.c.l.b16 %v492
        %v532 = vunpack.c.l.b16 %v493
        %v533 = vunpack.c.l.b16 %v494
        %v534 = vunpack.c.l.b16 %v495
        %v535 = vunpack.c.l.b16 %v496
        %v536 = vunpack.c.l.b16 %v497
        %v537 = vunpack.c.l.b16 %v498
        %v538 = vunpack.c.l.b16 %v499
        %v539 = vunpack.c.l.b16 %v500
        %v540 = vunpack.c.l.b16 %v501
        %v541 = vunpack.c.l.b16 %v502
        %v542 = vpack.c.b16 %v527, %v526
        %v543 = vpack.c.b16 %v529, %v528
        %v544 = vpack.c.b16 %v531, %v530
        %v545 = vpack.c.b16 %v533, %v532
        %v546 = vpack.c.b16 %v535, %v534
        %v547 = vpack.c.b16 %v537, %v536
        %v548 = vpack.c.b16 %v539, %v538
        %v549 = vpack.c.b16 %v541, %v540
        %558 = vmatprep.subr.bf16.mxu0 0
        %559 = vmatpush1.bf16.msra.mxu0 %v542
        %560 = vmatprep.subr.bf16.mxu0 0
        %561 = vmatpush1.bf16.msra.mxu0 %v543
        %562 = vmatprep.subr.bf16.mxu0 0
        %563 = vmatpush1.bf16.msra.mxu0 %v544
        %564 = vmatprep.subr.bf16.mxu0 0
        %565 = vmatpush1.bf16.msra.mxu0 %v545
        %566 = vmatprep.subr.bf16.mxu0 0
        %567 = vmatpush1.bf16.msra.mxu0 %v546
        %568 = vmatprep.subr.bf16.mxu0 0
        %569 = vmatpush1.bf16.msra.mxu0 %v547
        %570 = vmatprep.subr.bf16.mxu0 0
        %571 = vmatpush1.bf16.msra.mxu0 %v548
        %572 = vmatprep.subr.bf16.mxu0 0
        %573 = vmatpush1.bf16.msra.mxu0 %v549
        %574 = vmatprep.subr.bf16.mxu0 0
        %575 = vmatpush1.bf16.msra.mxu0 0
        %576 = vmatprep.subr.bf16.mxu0 0
        %577 = vmatpush1.bf16.msra.mxu0 0
        %578 = vmatprep.subr.bf16.mxu0 0
        %579 = vmatpush1.bf16.msra.mxu0 0
        %580 = vmatprep.subr.bf16.mxu0 0
        %581 = vmatpush1.bf16.msra.mxu0 0
        %582 = vmatprep.subr.bf16.mxu0 0
        %583 = vmatpush1.bf16.msra.mxu0 0
        %584 = vmatprep.subr.bf16.mxu0 0
        %585 = vmatpush1.bf16.msra.mxu0 0
        %586 = vmatprep.subr.bf16.mxu0 0
        %587 = vmatpush1.bf16.msra.mxu0 0
        %588 = vmatprep.subr.bf16.mxu0 0
        %589 = vmatpush1.bf16.msra.mxu0 0
        %590 = vmatprep.mubr.bf16.mxu0 0
        %591 = vmatmul.mubr.bf16.gmra.mrb[0].mxu0 %v483
        %v592 = vpop.f32.mrb[0].mxu0
        %v593 = vadd.f32 %v508, %v592
        %v594 = vpop.f32.mrb[0].mxu0
        %v595 = vpop.f32.mrb[0].mxu0
        %v596 = vadd.f32 %v508, %v595
        %v597 = vpop.f32.mrb[0].mxu0
        %598 = vmatprep.mubr.bf16.mxu0 0
        %599 = vmatmul.mubr.bf16.gmra.mrb[0].mxu0 %v484
        %v600 = vpop.f32.mrb[0].mxu0
        %v601 = vadd.f32 %v508, %v600
        %v602 = vpop.f32.mrb[0].mxu0
        %v603 = vpop.f32.mrb[0].mxu0
        %v604 = vadd.f32 %v508, %v603
        %v605 = vpop.f32.mrb[0].mxu0
        %606 = vmatprep.mubr.bf16.mxu0 0
        %607 = vmatmul.mubr.bf16.gmra.mrb[0].mxu0 %v485
        %v608 = vpop.f32.mrb[0].mxu0
        %v609 = vadd.f32 %v508, %v608
        %v610 = vpop.f32.mrb[0].mxu0
        %v611 = vpop.f32.mrb[0].mxu0
        %v612 = vadd.f32 %v508, %v611
        %v613 = vpop.f32.mrb[0].mxu0
        %614 = vmatprep.mubr.bf16.mxu0 0
        %615 = vmatmul.mubr.bf16.gmra.mrb[0].mxu0 %v486
        %v616 = vpop.f32.mrb[0].mxu0
        %v617 = vadd.f32 %v508, %v616
        %v618 = vpop.f32.mrb[0].mxu0
        %v619 = vpop.f32.mrb[0].mxu0
        %v620 = vadd.f32 %v508, %v619
        %v621 = vpop.f32.mrb[0].mxu0
        %622 = vdwg.mxu0
        %623 = vst [vmem:[%s271] sm:$0xff] %v593
        %624 = vst [vmem:[%s271 + $0x8] sm:$0xff] %v596
        %625 = vst [vmem:[%s271 + $0x10] sm:$0xff] %v601
        %626 = vst [vmem:[%s271 + $0x18] sm:$0xff] %v604
        %627 = vst [vmem:[%s271 + $0x20] sm:$0xff] %v609
        %628 = vst [vmem:[%s271 + $0x28] sm:$0xff] %v612
        %629 = vst [vmem:[%s271 + $0x30] sm:$0xff] %v617
        %630 = vst [vmem:[%s271 + $0x38] sm:$0xff] %v620
        %s631 = sand.u32 %s141, 1
        %s632 = scalar_lea.sflag [#allocation4], %s631
        %s633 = sand.u32 %s141, 1
        %s634 = smul.addr %s633, 64
        %s635 = scalar_lea.vmem [#allocation8], %s634
        // Predicated region
        $region53: #{tpu_custom_call.1} parent=39 // pred_check
          %p636 = pneg %p151
        $region54: #{tpu_custom_call.1} parent=39 // pred_check_branch
          %638 = sbr.rel (%p636) target = $region56
        $region55: #{tpu_custom_call.1} parent=39 // pred_region
          %s639 = smul.u32 8, %s23
          %s641 = ssub.s32 1024, 1024
          %642 = vsyncadd %s632, %s641
          %s643 = smul.addr %s639, 128
          %s644 = scalar_lea.hbm %s5, %s643
          %s645 = sshll.u32 %s635, 4
          %s646 = int_to_ptr.vmem [resolvable:$true] %s645
          %651 = dma.vmem_to_hbm [thread:$0]  %s646, 1024, %s644, %s632, 128, 128, 8
        $region56: #{tpu_custom_call.1} parent=39 // pred_fallthru
          _
      $region40: #{tpu_custom_call.1} parent=5 // pred_fallthru
        _
      %p652 = scmp.le.s32.totalorder 2, %s18
      // Predicated region
      $region57: #{tpu_custom_call.1} parent=5 // pred_check
        %p653 = pneg %p652
      $region58: #{tpu_custom_call.1} parent=5 // pred_check_branch
        %655 = sbr.rel (%p653) target = $region60
      $region59: #{tpu_custom_call.1} parent=5 // pred_region
        %s656 = ssub.s32 %s18, 2
        // Predicated region
        $region61: #{tpu_custom_call.1} parent=59 // pred_check
          %p657 = pneg %p157
        $region62: #{tpu_custom_call.1} parent=59 // pred_check_branch
          %659 = sbr.rel (%p657) target = $region64
        $region63: #{tpu_custom_call.1} parent=59 // pred_region
          %s660 = sand.u32 %s142, 1
          %s661 = scalar_lea.sflag [#allocation4], %s660
          %s662 = sand.u32 %s142, 1
          %s663 = smul.addr %s662, 64
          %s664 = scalar_lea.vmem [#allocation8], %s663
          %665 = dma.done %s661, 1024
        $region64: #{tpu_custom_call.1} parent=59 // pred_fallthru
          _
      $region60: #{tpu_custom_call.1} parent=5 // pred_fallthru
        _
    $region6: #{tpu_custom_call.1} parent=1 // loop_footer
      %s22 = sadd.s32 1, %s18
    $region7: #{tpu_custom_call.1} parent=1 // loop_footer_branch
      %17 = sbr.rel target = $region3
    $region8: #{tpu_custom_call.1} parent=1 // loop_exit
      _
    %666 = vsyncpa [#allocation3], 1
    %s667 = scalar_lea.sflag [#allocation3], 1
    %668 = vsyncpa %s667, 1
    %669 = vsyncpa [#allocation6], 1
    %670 = vsyncpa [#allocation4], 1
    %s671 = scalar_lea.sflag [#allocation4], 1
    %672 = vsyncpa %s671, 1

</llo_original>
